<compile_context>
chip_gen: v7x
topology: tpu7x:2x2x1
jax: 0.10.0
libtpu: 0.0.40
codegen_flags: <defaults>
</compile_context>

<pallas_src>
import math
import jax
import jax.numpy as jnp
from jax.experimental import pallas as pl
from jax.experimental.pallas import tpu as pltpu


def pair(t):
    return t if isinstance(t, tuple) else (t, t)


# ----------------------------- in-kernel math -----------------------------

def _gelu(x):
    # tanh-form GELU: ~6 VPU ops + one EUP tanh per element (the erf-series
    # form costs 12-14 VALU ops).  Computed in f32 (v5e has no bf16 VPU/EUP).
    c = 0.7978845608028654  # sqrt(2/pi)
    return 0.5 * x * (1.0 + jnp.tanh(c * (x + 0.044715 * (x * x * x))))


# ------------------------------- kernels ----------------------------------

def _fused_decoder_kernel(x_ref, w1s_ref, w2s_ref, w1c_ref, b1c_ref,
                          w2bd_ref, b2c_ref, w3bd_ref, b3c_ref, o_ref):
    """mlp_spatial (layers 1-2) -> folded(spatial L3 @ temporal L1) ->
    block-diagonal temporal L2/L3; all ph*pw positions batched along lanes.

    x_ref:    (tm, cin)            f32  (cast to bf16 in-kernel)
    w1c_ref:  (nh2, n_pos*nh)      bf16 (w3s[pos] @ w1t, positions concatenated)
    w2bd_ref: (n_pos*nh, n_pos*nh) bf16 (block-diag of temporal w2)
    w3bd_ref: (n_pos*nh, n_pos*P)  bf16 (block-diag of temporal w3)
    o_ref:    (tm, n_pos*P)        f32
    """
    f32, bf16 = jnp.float32, jnp.bfloat16
    x = x_ref[...].astype(bf16)

    # --- mlp_spatial layers 1-2 (no bias) ---
    h = jnp.dot(x, w1s_ref[...], preferred_element_type=f32)
    h = _gelu(h).astype(bf16)
    h = jnp.dot(h, w2s_ref[...], preferred_element_type=f32)
    h = _gelu(h).astype(bf16)                                   # (tm, nh2)

    # --- spatial L3 folded into temporal L1, all positions at once ---
    t = jnp.dot(h, w1c_ref[...], preferred_element_type=f32) + b1c_ref[...]
    t = _gelu(t).astype(bf16)                                   # (tm, n_pos*nh)
    t = jnp.dot(t, w2bd_ref[...], preferred_element_type=f32) + b2c_ref[...]
    t = _gelu(t).astype(bf16)
    z = jnp.dot(t, w3bd_ref[...], preferred_element_type=f32) + b3c_ref[...]
    o_ref[...] = z.astype(o_ref.dtype)                          # (tm, n_pos*P)


def _temporal_kernel(x_ref, w1_ref, b1_ref, w2_ref, b2_ref, w3_ref, b3_ref,
                     o_ref):
    """mlp_temporal only (patch == 1 path)."""
    f32, bf16 = jnp.float32, jnp.bfloat16
    x = x_ref[...].astype(bf16)
    t = jnp.dot(x, w1_ref[...], preferred_element_type=f32) + b1_ref[...]
    t = _gelu(t).astype(bf16)
    t = jnp.dot(t, w2_ref[...], preferred_element_type=f32) + b2_ref[...]
    t = _gelu(t).astype(bf16)
    z = jnp.dot(t, w3_ref[...], preferred_element_type=f32) + b3_ref[...]
    o_ref[...] = z.astype(o_ref.dtype)


# ------------------------------ tiling utils -------------------------------

def _vmem_limits():
    """(compiler scoped-VMEM limit, working-set budget), generation-aware:
    ~48 MiB on v7x (64 MiB physical), ~96 MiB on v5e/v6e (128 MiB physical)."""
    try:
        cap = int(pltpu.get_tpu_info().vmem_capacity_bytes)
    except Exception:
        cap = 64 * 1024 * 1024  # conservative fallback (v7x physical)
    limit = min((cap * 3) // 4, 100 * 1024 * 1024)
    return limit, (limit * 3) // 4


def _pick_row_tile(n_rows, per_row_bytes, fixed_bytes, budget):
    """Largest row tile that fits the VMEM budget while keeping >= 2 grid
    steps (keeps both v7x TensorCores busy).  Rows are padded in the wrapper
    to a multiple of the tile, so the tile need not divide n_rows."""
    candidates = (4096, 2048, 1024, 512, 256, 128, 64, 32, 16)
    fitting = [t for t in candidates if fixed_bytes + t * per_row_bytes <= budget]
    if not fitting:
        fitting = [16]
    for t in fitting:
        if pl.cdiv(n_rows, t) >= 2:
            return t
    return fitting[-1]          # n_rows <= smallest tile: single-step grid


def _full_spec(a):
    # full-array block, constant index map: fetched once, never re-DMA'd
    return pl.BlockSpec(a.shape, lambda i, nd=a.ndim: (0,) * nd)


def _nbytes(arrs):
    return sum(int(a.size) * a.dtype.itemsize for a in arrs)


# --------------------------- module equivalent -----------------------------

class MLPDecoderPallas:
    def __init__(self, pred_len, n_input, stride_size, img_size, *, n_hidden,
                 c_groups, inner_channels=16, grid_size=30, key=None,
                 dtype=jnp.float32):
        self.pred_len = pred_len
        self.n_input = n_input
        self.c_groups = c_groups
        self.inner_channels = inner_channels
        self.n_hidden = n_hidden
        self.patch_height, self.patch_width = pair(stride_size)
        self.img_height, self.img_width = pair(img_size)
        self.grid_height, self.grid_width = pair(grid_size)

        ph, pw = self.patch_height, self.patch_width
        L = pred_len * inner_channels
        n_pos = ph * pw
        nh2 = n_hidden // 2
        nh = n_hidden
        out_dim_s = L * n_pos

        spatial_dims = [(n_input * c_groups, nh2), (nh2, nh2), (nh2, out_dim_s)]
        temporal_in = L if ph > 1 else n_input * c_groups
        temporal_dims = [(temporal_in, nh), (nh, nh), (nh, pred_len)]

        keys = jax.random.split(key, 9)

        def init_w(k, cin, cout):
            bound = 1.0 / math.sqrt(cin)
            return jax.random.uniform(k, (cin, cout), dtype, -bound, bound)

        def init_b(k, cin, cout):
            bound = 1.0 / math.sqrt(cin)
            return jax.random.uniform(k, (1, cout), dtype, -bound, bound)

        # master (f32) parameters, PyTorch channel ordering:
        #   spatial_w[2] column index c = l*(ph*pw) + dh*pw + dw
        self.spatial_w = [init_w(keys[i], *spatial_dims[i]) for i in range(3)]
        self.temporal_w = [init_w(keys[3 + i], *temporal_dims[i]) for i in range(3)]
        self.temporal_b = [init_b(keys[6 + i], *temporal_dims[i]) for i in range(3)]

        # ---- kernel-side parameters ----
        self.w1s_bf = self.spatial_w[0].astype(jnp.bfloat16)
        self.w2s_bf = self.spatial_w[1].astype(jnp.bfloat16)

        if ph > 1:
            # Fold spatial layer-3 into temporal layer-1 (no nonlinearity
            # between them); concatenate the ph*pw positions along columns.
            w3s_r = self.spatial_w[2].reshape(nh2, L, n_pos)       # (k, l, pos)
            w1cat = jnp.einsum('klp,lj->kpj', w3s_r, self.temporal_w[0])
            self.w1cat_bf = w1cat.reshape(nh2, n_pos * nh).astype(jnp.bfloat16)
            self.b1cat = jnp.tile(self.temporal_b[0], (1, n_pos))
            # Block-diagonal temporal layers 2/3 (same block per position).
            # TODO(synk): for very large n_pos*n_hidden a per-position
            # lax.fori_loop would waste fewer FLOPs than the block-diag matmul.
            eye = jnp.eye(n_pos, dtype=jnp.float32)
            self.w2bd_bf = jnp.kron(eye, self.temporal_w[1]).astype(jnp.bfloat16)
            self.b2cat = jnp.tile(self.temporal_b[1], (1, n_pos))
            self.w3bd_bf = jnp.kron(eye, self.temporal_w[2]).astype(jnp.bfloat16)
            self.b3cat = jnp.tile(self.temporal_b[2], (1, n_pos))
        else:
            self.w1t_bf = self.temporal_w[0].astype(jnp.bfloat16)
            self.w2t_bf = self.temporal_w[1].astype(jnp.bfloat16)
            self.w3t_bf = self.temporal_w[2].astype(jnp.bfloat16)
            self.b1t, self.b2t, self.b3t = self.temporal_b

    # ---------------------------- pallas calls -----------------------------

    def _call_fused(self, xr):
        n_rows, cin = xr.shape
        n_pos = self.patch_height * self.patch_width
        nh2, nh, P = self.n_hidden // 2, self.n_hidden, self.pred_len

        weights = (self.w1s_bf, self.w2s_bf, self.w1cat_bf, self.b1cat,
                   self.w2bd_bf, self.b2cat, self.w3bd_bf, self.b3cat)
        limit, budget = _vmem_limits()
        fixed = 2 * _nbytes(weights)                    # default double-buffering
        per_row = (2 * (cin * 4 + n_pos * P * 4)        # double-buffered I/O tiles
                   + 6 * cin + 6 * nh2 + 6 * n_pos * nh + 4 * n_pos * P)
        tm = _pick_row_tile(n_rows, per_row, fixed, budget)
        grid_n = pl.cdiv(n_rows, tm)
        rows_pad = grid_n * tm
        if rows_pad != n_rows:
            xr = jnp.pad(xr, ((0, rows_pad - n_rows), (0, 0)))

        in_specs = [pl.BlockSpec((tm, cin), lambda i: (i, 0))] + \
                   [_full_spec(a) for a in weights]
        out_specs = pl.BlockSpec((tm, n_pos * P), lambda i: (i, 0))

        out = pl.pallas_call(
            _fused_decoder_kernel,
            out_shape=jax.ShapeDtypeStruct((rows_pad, n_pos * P), jnp.float32),
            grid=(grid_n,),
            in_specs=in_specs,
            out_specs=out_specs,
            compiler_params=pltpu.CompilerParams(
                dimension_semantics=("parallel",),
                vmem_limit_bytes=limit),
        )(xr, *weights)
        return out[:n_rows]

    def _call_temporal(self, xr):
        n_rows, cin = xr.shape
        nh, P = self.n_hidden, self.pred_len
        weights = (self.w1t_bf, self.b1t, self.w2t_bf, self.b2t,
                   self.w3t_bf, self.b3t)
        limit, budget = _vmem_limits()
        fixed = 2 * _nbytes(weights)
        per_row = 2 * (cin * 4 + P * 4) + 6 * cin + 6 * nh + 4 * P
        tm = _pick_row_tile(n_rows, per_row, fixed, budget)
        grid_n = pl.cdiv(n_rows, tm)
        rows_pad = grid_n * tm
        if rows_pad != n_rows:
            xr = jnp.pad(xr, ((0, rows_pad - n_rows), (0, 0)))

        in_specs = [pl.BlockSpec((tm, cin), lambda i: (i, 0))] + \
                   [_full_spec(a) for a in weights]
        out_specs = pl.BlockSpec((tm, P), lambda i: (i, 0))

        out = pl.pallas_call(
            _temporal_kernel,
            out_shape=jax.ShapeDtypeStruct((rows_pad, P), jnp.float32),
            grid=(grid_n,),
            in_specs=in_specs,
            out_specs=out_specs,
            compiler_params=pltpu.CompilerParams(
                dimension_semantics=("parallel",),
                vmem_limit_bytes=limit),
        )(xr, *weights)
        return out[:n_rows]

    # ------------------------------ forward --------------------------------

    def __call__(self, x):
        b, s, d = x.shape
        ph, pw = self.patch_height, self.patch_width
        h = self.img_height // ph
        w = self.img_width // pw
        cg = self.c_groups
        P = self.pred_len
        # 'b (h w cg) d -> (b h w) (cg d)': contiguous reshape, no data movement;
        # keep f32 and cast to bf16 inside the kernel.
        xr = x.reshape(b, h, w, cg, d).reshape(b * h * w, cg * d)

        if ph > 1:
            out = self._call_fused(xr)                 # (b*h*w, ph*pw*P)
            z = out.reshape(b, h, w, ph, pw, P)
            z = z.transpose(0, 5, 1, 3, 2, 4)          # (b, P, h, dh, w, dw)
            return z.reshape(b, P, h * ph, w * pw)
        else:
            out = self._call_temporal(xr)              # (b*h*w, P)
            return out.reshape(b, h, w, P).transpose(0, 3, 1, 2)


# ----------------------------- pure-JAX reference --------------------------

def reference_forward(dec: MLPDecoderPallas, x):
    """Straight f32 PyTorch-semantics reference (exact erf GELU)."""
    gelu = lambda v: jax.nn.gelu(v, approximate=False)
    b, s, d = x.shape
    ph, pw = dec.patch_height, dec.patch_width
    h = dec.img_height // ph
    w = dec.img_width // pw
    cg = dec.c_groups

    xr = x.reshape(b, h, w, cg, d).reshape(b * h * w, cg * d)
    if ph > 1:
        y = xr
        for i, wm in enumerate(dec.spatial_w):
            y = y @ wm
            if i < 2:
                y = gelu(y)
        L = dec.pred_len * dec.inner_channels
        # pixel shuffle: 'b (l dh dw) h w -> b l (h dh) (w dw)'
        y = y.reshape(b, h, w, L, ph, pw).transpose(0, 1, 4, 2, 5, 3)
        xr = y.reshape(b * h * ph * w * pw, L)
        H, W = h * ph, w * pw
    else:
        H, W = h, w
    z = xr
    for i, (wm, bm) in enumerate(zip(dec.temporal_w, dec.temporal_b)):
        z = z @ wm + bm
        if i < 2:
            z = gelu(z)
    return z.reshape(b, H, W, dec.pred_len).transpose(0, 3, 1, 2)


# ---------------------------------- main -----------------------------------

if __name__ == "__main__":
    key = jax.random.PRNGKey(0)
    k_param, k_param2, k_x, k_x2 = jax.random.split(key, 4)

    pred_len = 2
    n_input = 4
    img_size = 8
    n_hidden = 32
    c_groups = 2
    inner_channels = 4
    batch = 2

    # --- main path: patch 2 (spatial MLP + pixel shuffle + temporal MLP) ---
    stride_size = 2
    dec = MLPDecoderPallas(pred_len, n_input, stride_size, img_size,
                           n_hidden=n_hidden, c_groups=c_groups,
                           inner_channels=inner_channels, key=k_param)
    h = img_size // stride_size
    w = img_size // stride_size
    seq = h * w * c_groups
    x = jax.random.normal(k_x, (batch, seq, n_input), dtype=jnp.float32)

    out = jax.block_until_ready(dec(x))
    ref = reference_forward(dec, x)
    assert out.shape == (batch, pred_len, img_size, img_size), out.shape
    err = float(jnp.max(jnp.abs(out - ref)))
    assert err < 3e-2, err   # bf16 operands + tanh-GELU vs exact-f32 reference

    # --- patch == 1 path: temporal MLP only ---
    dec1 = MLPDecoderPallas(pred_len, n_input, 1, img_size,
                            n_hidden=n_hidden, c_groups=c_groups,
                            inner_channels=inner_channels, key=k_param2)
    seq1 = img_size * img_size * c_groups
    x1 = jax.random.normal(k_x2, (batch, seq1, n_input), dtype=jnp.float32)

    out1 = jax.block_until_ready(dec1(x1))
    ref1 = reference_forward(dec1, x1)
    assert out1.shape == (batch, pred_len, img_size, img_size), out1.shape
    err1 = float(jnp.max(jnp.abs(out1 - ref1)))
    assert err1 < 3e-2, err1

    print("KERNEL_OK")
</pallas_src>

<mosaic_0001>
module attributes {stable_mosaic.version = 11 : i64} {
  func.func @_fused_decoder_kernel(%arg0: i32, %arg1: memref<16x8xf32, #tpu.memory_space<vmem>>, %arg2: memref<8x16xbf16, #tpu.memory_space<vmem>>, %arg3: memref<16x16xbf16, #tpu.memory_space<vmem>>, %arg4: memref<16x128xbf16, #tpu.memory_space<vmem>>, %arg5: memref<1x128xf32, #tpu.memory_space<vmem>>, %arg6: memref<128x128xbf16, #tpu.memory_space<vmem>>, %arg7: memref<1x128xf32, #tpu.memory_space<vmem>>, %arg8: memref<128x8xbf16, #tpu.memory_space<vmem>>, %arg9: memref<1x8xf32, #tpu.memory_space<vmem>>, %arg10: memref<16x8xf32, #tpu.memory_space<vmem>>) attributes {dimension_semantics = [#tpu.dimension_semantics<parallel>], iteration_bounds = array<i64: 2>, scalar_prefetch = 0 : i64, scratch_operands = 0 : i64, tpu.core_type = #tpu.core_type<tc>, window_params = [{transform_indices = @transform_0, window_bounds = array<i64: 16, 8>}, {pipeline_mode = #tpu.pipeline_mode<synchronous>, transform_indices = @transform_1, window_bounds = array<i64: 8, 16>}, {pipeline_mode = #tpu.pipeline_mode<synchronous>, transform_indices = @transform_2, window_bounds = array<i64: 16, 16>}, {pipeline_mode = #tpu.pipeline_mode<synchronous>, transform_indices = @transform_3, window_bounds = array<i64: 16, 128>}, {pipeline_mode = #tpu.pipeline_mode<synchronous>, transform_indices = @transform_4, window_bounds = array<i64: 1, 128>}, {pipeline_mode = #tpu.pipeline_mode<synchronous>, transform_indices = @transform_5, window_bounds = array<i64: 128, 128>}, {pipeline_mode = #tpu.pipeline_mode<synchronous>, transform_indices = @transform_6, window_bounds = array<i64: 1, 128>}, {pipeline_mode = #tpu.pipeline_mode<synchronous>, transform_indices = @transform_7, window_bounds = array<i64: 128, 8>}, {pipeline_mode = #tpu.pipeline_mode<synchronous>, transform_indices = @transform_8, window_bounds = array<i64: 1, 8>}, {transform_indices = @transform_9, window_bounds = array<i64: 16, 8>}]} {
    %c0 = arith.constant 0 : index
    %c0_0 = arith.constant 0 : index
    %0 = vector.load %arg1[%c0, %c0_0] : memref<16x8xf32, #tpu.memory_space<vmem>>, vector<16x8xf32>
    %1 = arith.truncf %0 : vector<16x8xf32> to vector<16x8xbf16>
    %c0_1 = arith.constant 0 : index
    %c0_2 = arith.constant 0 : index
    %2 = vector.load %arg2[%c0_1, %c0_2] : memref<8x16xbf16, #tpu.memory_space<vmem>>, vector<8x16xbf16>
    %cst = arith.constant dense<0.000000e+00> : vector<16x16xf32>
    %3 = tpu.matmul %1, %2, %cst {dimension_numbers = #tpu.dot_dimension_numbers<[1], [0], [0], [1], [0, 0, 1, 1], [], []>} : vector<16x8xbf16>, vector<8x16xbf16>, vector<16x16xf32> -> vector<16x16xf32>
    %cst_3 = arith.constant 5.000000e-01 : f32
    %4 = vector.broadcast %cst_3 : f32 to vector<16x16xf32>
    %5 = arith.mulf %4, %3 : vector<16x16xf32>
    %6 = arith.mulf %3, %3 : vector<16x16xf32>
    %7 = arith.mulf %6, %3 : vector<16x16xf32>
    %cst_4 = arith.constant 4.471500e-02 : f32
    %8 = vector.broadcast %cst_4 : f32 to vector<16x16xf32>
    %9 = arith.mulf %8, %7 : vector<16x16xf32>
    %10 = arith.addf %3, %9 : vector<16x16xf32>
    %cst_5 = arith.constant 0.797884583 : f32
    %11 = vector.broadcast %cst_5 : f32 to vector<16x16xf32>
    %12 = arith.mulf %11, %10 : vector<16x16xf32>
    %13 = math.tanh %12 : vector<16x16xf32>
    %cst_6 = arith.constant 1.000000e+00 : f32
    %14 = vector.broadcast %cst_6 : f32 to vector<16x16xf32>
    %15 = arith.addf %14, %13 : vector<16x16xf32>
    %16 = arith.mulf %5, %15 : vector<16x16xf32>
    %17 = arith.truncf %16 : vector<16x16xf32> to vector<16x16xbf16>
    %c0_7 = arith.constant 0 : index
    %c0_8 = arith.constant 0 : index
    %18 = vector.load %arg3[%c0_7, %c0_8] : memref<16x16xbf16, #tpu.memory_space<vmem>>, vector<16x16xbf16>
    %cst_9 = arith.constant dense<0.000000e+00> : vector<16x16xf32>
    %19 = tpu.matmul %17, %18, %cst_9 {dimension_numbers = #tpu.dot_dimension_numbers<[1], [0], [0], [1], [0, 0, 1, 1], [], []>} : vector<16x16xbf16>, vector<16x16xbf16>, vector<16x16xf32> -> vector<16x16xf32>
    %cst_10 = arith.constant 5.000000e-01 : f32
    %20 = vector.broadcast %cst_10 : f32 to vector<16x16xf32>
    %21 = arith.mulf %20, %19 : vector<16x16xf32>
    %22 = arith.mulf %19, %19 : vector<16x16xf32>
    %23 = arith.mulf %22, %19 : vector<16x16xf32>
    %cst_11 = arith.constant 4.471500e-02 : f32
    %24 = vector.broadcast %cst_11 : f32 to vector<16x16xf32>
    %25 = arith.mulf %24, %23 : vector<16x16xf32>
    %26 = arith.addf %19, %25 : vector<16x16xf32>
    %cst_12 = arith.constant 0.797884583 : f32
    %27 = vector.broadcast %cst_12 : f32 to vector<16x16xf32>
    %28 = arith.mulf %27, %26 : vector<16x16xf32>
    %29 = math.tanh %28 : vector<16x16xf32>
    %cst_13 = arith.constant 1.000000e+00 : f32
    %30 = vector.broadcast %cst_13 : f32 to vector<16x16xf32>
    %31 = arith.addf %30, %29 : vector<16x16xf32>
    %32 = arith.mulf %21, %31 : vector<16x16xf32>
    %33 = arith.truncf %32 : vector<16x16xf32> to vector<16x16xbf16>
    %c0_14 = arith.constant 0 : index
    %c0_15 = arith.constant 0 : index
    %34 = vector.load %arg4[%c0_14, %c0_15] : memref<16x128xbf16, #tpu.memory_space<vmem>>, vector<16x128xbf16>
    %cst_16 = arith.constant dense<0.000000e+00> : vector<16x128xf32>
    %35 = tpu.matmul %33, %34, %cst_16 {dimension_numbers = #tpu.dot_dimension_numbers<[1], [0], [0], [1], [0, 0, 1, 1], [], []>} : vector<16x16xbf16>, vector<16x128xbf16>, vector<16x128xf32> -> vector<16x128xf32>
    %c0_17 = arith.constant 0 : index
    %c0_18 = arith.constant 0 : index
    %36 = vector.load %arg5[%c0_17, %c0_18] : memref<1x128xf32, #tpu.memory_space<vmem>>, vector<1x128xf32>
    %37 = vector.broadcast %36 : vector<1x128xf32> to vector<16x128xf32>
    %38 = arith.addf %35, %37 : vector<16x128xf32>
    %cst_19 = arith.constant 5.000000e-01 : f32
    %39 = vector.broadcast %cst_19 : f32 to vector<16x128xf32>
    %40 = arith.mulf %39, %38 : vector<16x128xf32>
    %41 = arith.mulf %38, %38 : vector<16x128xf32>
    %42 = arith.mulf %41, %38 : vector<16x128xf32>
    %cst_20 = arith.constant 4.471500e-02 : f32
    %43 = vector.broadcast %cst_20 : f32 to vector<16x128xf32>
    %44 = arith.mulf %43, %42 : vector<16x128xf32>
    %45 = arith.addf %38, %44 : vector<16x128xf32>
    %cst_21 = arith.constant 0.797884583 : f32
    %46 = vector.broadcast %cst_21 : f32 to vector<16x128xf32>
    %47 = arith.mulf %46, %45 : vector<16x128xf32>
    %48 = math.tanh %47 : vector<16x128xf32>
    %cst_22 = arith.constant 1.000000e+00 : f32
    %49 = vector.broadcast %cst_22 : f32 to vector<16x128xf32>
    %50 = arith.addf %49, %48 : vector<16x128xf32>
    %51 = arith.mulf %40, %50 : vector<16x128xf32>
    %52 = arith.truncf %51 : vector<16x128xf32> to vector<16x128xbf16>
    %c0_23 = arith.constant 0 : index
    %c0_24 = arith.constant 0 : index
    %53 = vector.load %arg6[%c0_23, %c0_24] : memref<128x128xbf16, #tpu.memory_space<vmem>>, vector<128x128xbf16>
    %cst_25 = arith.constant dense<0.000000e+00> : vector<16x128xf32>
    %54 = tpu.matmul %52, %53, %cst_25 {dimension_numbers = #tpu.dot_dimension_numbers<[1], [0], [0], [1], [0, 0, 1, 1], [], []>} : vector<16x128xbf16>, vector<128x128xbf16>, vector<16x128xf32> -> vector<16x128xf32>
    %c0_26 = arith.constant 0 : index
    %c0_27 = arith.constant 0 : index
    %55 = vector.load %arg7[%c0_26, %c0_27] : memref<1x128xf32, #tpu.memory_space<vmem>>, vector<1x128xf32>
    %56 = vector.broadcast %55 : vector<1x128xf32> to vector<16x128xf32>
    %57 = arith.addf %54, %56 : vector<16x128xf32>
    %cst_28 = arith.constant 5.000000e-01 : f32
    %58 = vector.broadcast %cst_28 : f32 to vector<16x128xf32>
    %59 = arith.mulf %58, %57 : vector<16x128xf32>
    %60 = arith.mulf %57, %57 : vector<16x128xf32>
    %61 = arith.mulf %60, %57 : vector<16x128xf32>
    %cst_29 = arith.constant 4.471500e-02 : f32
    %62 = vector.broadcast %cst_29 : f32 to vector<16x128xf32>
    %63 = arith.mulf %62, %61 : vector<16x128xf32>
    %64 = arith.addf %57, %63 : vector<16x128xf32>
    %cst_30 = arith.constant 0.797884583 : f32
    %65 = vector.broadcast %cst_30 : f32 to vector<16x128xf32>
    %66 = arith.mulf %65, %64 : vector<16x128xf32>
    %67 = math.tanh %66 : vector<16x128xf32>
    %cst_31 = arith.constant 1.000000e+00 : f32
    %68 = vector.broadcast %cst_31 : f32 to vector<16x128xf32>
    %69 = arith.addf %68, %67 : vector<16x128xf32>
    %70 = arith.mulf %59, %69 : vector<16x128xf32>
    %71 = arith.truncf %70 : vector<16x128xf32> to vector<16x128xbf16>
    %c0_32 = arith.constant 0 : index
    %c0_33 = arith.constant 0 : index
    %72 = vector.load %arg8[%c0_32, %c0_33] : memref<128x8xbf16, #tpu.memory_space<vmem>>, vector<128x8xbf16>
    %cst_34 = arith.constant dense<0.000000e+00> : vector<16x8xf32>
    %73 = tpu.matmul %71, %72, %cst_34 {dimension_numbers = #tpu.dot_dimension_numbers<[1], [0], [0], [1], [0, 0, 1, 1], [], []>} : vector<16x128xbf16>, vector<128x8xbf16>, vector<16x8xf32> -> vector<16x8xf32>
    %c0_35 = arith.constant 0 : index
    %c0_36 = arith.constant 0 : index
    %74 = vector.load %arg9[%c0_35, %c0_36] : memref<1x8xf32, #tpu.memory_space<vmem>>, vector<1x8xf32>
    %75 = vector.broadcast %74 : vector<1x8xf32> to vector<16x8xf32>
    %76 = arith.addf %73, %75 : vector<16x8xf32>
    %c0_37 = arith.constant 0 : index
    %c0_38 = arith.constant 0 : index
    %77 = vector.load %arg10[%c0_37, %c0_38] : memref<16x8xf32, #tpu.memory_space<vmem>>, vector<16x8xf32>
    tpu.vector_store %arg10[%c0_37, %c0_38], %76 {strides = array<i32>} : memref<16x8xf32, #tpu.memory_space<vmem>>, vector<16x8xf32>,
    return
  }
  func.func @transform_0(%arg0: i32) -> (i32, i32) {
    %c0_i32 = arith.constant 0 : i32
    %c0_i32_0 = arith.constant 0 : i32
    return %arg0, %c0_i32 : i32, i32
  }
  func.func @transform_1(%arg0: i32) -> (i32, i32) {
    %c0_i32 = arith.constant 0 : i32
    %c0_i32_0 = arith.constant 0 : i32
    %c0_i32_1 = arith.constant 0 : i32
    return %c0_i32, %c0_i32_0 : i32, i32
  }
  func.func @transform_2(%arg0: i32) -> (i32, i32) {
    %c0_i32 = arith.constant 0 : i32
    %c0_i32_0 = arith.constant 0 : i32
    %c0_i32_1 = arith.constant 0 : i32
    return %c0_i32, %c0_i32_0 : i32, i32
  }
  func.func @transform_3(%arg0: i32) -> (i32, i32) {
    %c0_i32 = arith.constant 0 : i32
    %c0_i32_0 = arith.constant 0 : i32
    %c0_i32_1 = arith.constant 0 : i32
    return %c0_i32, %c0_i32_0 : i32, i32
  }
  func.func @transform_4(%arg0: i32) -> (i32, i32) {
    %c0_i32 = arith.constant 0 : i32
    %c0_i32_0 = arith.constant 0 : i32
    %c0_i32_1 = arith.constant 0 : i32
    return %c0_i32, %c0_i32_0 : i32, i32
  }
  func.func @transform_5(%arg0: i32) -> (i32, i32) {
    %c0_i32 = arith.constant 0 : i32
    %c0_i32_0 = arith.constant 0 : i32
    %c0_i32_1 = arith.constant 0 : i32
    return %c0_i32, %c0_i32_0 : i32, i32
  }
  func.func @transform_6(%arg0: i32) -> (i32, i32) {
    %c0_i32 = arith.constant 0 : i32
    %c0_i32_0 = arith.constant 0 : i32
    %c0_i32_1 = arith.constant 0 : i32
    return %c0_i32, %c0_i32_0 : i32, i32
  }
  func.func @transform_7(%arg0: i32) -> (i32, i32) {
    %c0_i32 = arith.constant 0 : i32
    %c0_i32_0 = arith.constant 0 : i32
    %c0_i32_1 = arith.constant 0 : i32
    return %c0_i32, %c0_i32_0 : i32, i32
  }
  func.func @transform_8(%arg0: i32) -> (i32, i32) {
    %c0_i32 = arith.constant 0 : i32
    %c0_i32_0 = arith.constant 0 : i32
    %c0_i32_1 = arith.constant 0 : i32
    return %c0_i32, %c0_i32_0 : i32, i32
  }
  func.func @transform_9(%arg0: i32) -> (i32, i32) {
    %c0_i32 = arith.constant 0 : i32
    %c0_i32_0 = arith.constant 0 : i32
    return %arg0, %c0_i32 : i32, i32
  }
}

</mosaic_0001>

<llo_original>
// kernel: tpu_custom_call.1
$region0: #{tpu_custom_call.1}
  #allocation0 [shape = 'u32[]', space=smem, size = 0x4, offset = 0x4, fixed_abs, tag = 'smem constant byte address 0x4 - core index']
  #allocation1 [shape = 'u32[144,128]{1,0:T(1,128)}', space=vmem, size = 0x12000, scoped, tag = 'internal scratch']
  %s0 = inlined_call_operand.vmem [shape: f32[32,8], index: 0, kind: input, shape index: {}]
  %s1 = inlined_call_operand.vmem [shape: bf16[8,16], index: 1, kind: input, shape index: {}]
  %s2 = inlined_call_operand.vmem [shape: bf16[16,16], index: 2, kind: input, shape index: {}]
  %s3 = inlined_call_operand.vmem [shape: bf16[16,128], index: 3, kind: input, shape index: {}]
  %s4 = inlined_call_operand.vmem [shape: f32[1,128], index: 4, kind: input, shape index: {}]
  %s5 = inlined_call_operand.vmem [shape: bf16[128,128], index: 5, kind: input, shape index: {}]
  %s6 = inlined_call_operand.vmem [shape: f32[1,128], index: 6, kind: input, shape index: {}]
  %s7 = inlined_call_operand.vmem [shape: bf16[128,8], index: 7, kind: input, shape index: {}]
  %s8 = inlined_call_operand.vmem [shape: f32[1,8], index: 8, kind: input, shape index: {}]
  %s9 = inlined_call_operand.vmem [shape: f32[32,8], index: 9, kind: output, shape index: {}]
  %s10 = sld [smem:[#allocation0]]
  $region69: #{tpu_custom_call.1} parent=0
    _
  %s12 = ssub.s32 1, %s10
  %s13 = scalar_select 0, %s12, %s10
  loop: start=0, step=1, limit=4
  $region2: #{tpu_custom_call.1} parent=0 // loop_pre_header
    _
  $region3: #{tpu_custom_call.1} parent=0 // loop_header
    %s15 = sphi 0, %s19
    %p16 = scmp.ge.s32.totalorder %s15, 4
    %s25 = sphi 0, %s27
    %s28 = sphi 0, %s25
    %s29 = sphi 0, %s28
    %s45 = sphi 0, %s29
    %s49 = sphi 0, %s49
    %s51 = sphi 0, %s49
    %s52 = sphi 0, %s51
    %s66 = sphi 0, %s52
    %s70 = sphi 0, %s70
    %s72 = sphi 0, %s70
    %s73 = sphi 0, %s72
    %s87 = sphi 0, %s73
    %s91 = sphi 0, %s91
    %s93 = sphi 0, %s91
    %s94 = sphi 0, %s93
    %s108 = sphi 0, %s94
    %s112 = sphi 0, %s112
    %s114 = sphi 0, %s112
    %s115 = sphi 0, %s114
    %s129 = sphi 0, %s115
    %s133 = sphi 0, %s133
    %s135 = sphi 0, %s133
    %s136 = sphi 0, %s135
    %s150 = sphi 0, %s136
    %s154 = sphi 0, %s154
    %s156 = sphi 0, %s154
    %s157 = sphi 0, %s156
    %s171 = sphi 0, %s157
    %s175 = sphi 0, %s175
    %s177 = sphi 0, %s175
    %s178 = sphi 0, %s177
    %s192 = sphi 0, %s178
    %s196 = sphi 0, %s196
    %s198 = sphi 0, %s196
    %s199 = sphi 0, %s198
    %s213 = sphi 0, %s199
    %s219 = sphi 0, %s221
    %s222 = sphi 0, %s219
    %s223 = sphi 0, %s222
    %s239 = sphi 0, %s223
  $region4: #{tpu_custom_call.1} parent=0 // loop_header_branch
    %18 = sbr.rel (%p16) target = $region8
  $region5: #{tpu_custom_call.1} parent=0 // loop_body
    %s20 = ssub.s32 %s15, 1
    %s21 = ssub.s32 %s15, 2
    %s22 = sadd.s32 %s15, 1
    %s23 = ssub.s32 %s15, %s22
    %p24 = scmp.eq.s32.totalorder %s23, 0
    %s26 = sadd.s32 %s25, 1
    %s27 = scalar_select %p24, %s25, %s26
    %p30 = pneg %p24
    %p31 = scmp.eq.s32.totalorder %s15, 1
    %p32 = por %p30, %p31
    %p33 = scmp.ne.s32.totalorder %s25, %s28
    %p34 = scmp.eq.s32.totalorder %s15, 0
    %p35 = por %p33, %p34
    %p36 = scmp.ne.s32.totalorder %s25, %s28
    %p37 = scmp.eq.s32.totalorder %s20, 1
    %p38 = por %p36, %p37
    %p39 = scmp.ne.s32.totalorder %s28, %s29
    %p40 = scmp.eq.s32.totalorder %s20, 0
    %p41 = por %p39, %p40
    %p42 = scmp.ne.s32.totalorder %s28, %s29
    %p43 = scmp.eq.s32.totalorder %s21, 1
    %p44 = por %p42, %p43
    %p46 = scmp.ne.s32.totalorder %s29, %s45
    %p47 = scmp.eq.s32.totalorder %s21, 0
    %p48 = por %p46, %p47
    %s50 = sadd.s32 %s49, 1
    %p53 = scmp.eq.s32.totalorder %s15, 1
    %p54 = scmp.ne.s32.totalorder %s49, %s51
    %p55 = scmp.eq.s32.totalorder %s15, 0
    %p56 = por %p54, %p55
    %p57 = scmp.ne.s32.totalorder %s49, %s51
    %p58 = scmp.eq.s32.totalorder %s20, 1
    %p59 = por %p57, %p58
    %p60 = scmp.ne.s32.totalorder %s51, %s52
    %p61 = scmp.eq.s32.totalorder %s20, 0
    %p62 = por %p60, %p61
    %p63 = scmp.ne.s32.totalorder %s51, %s52
    %p64 = scmp.eq.s32.totalorder %s21, 1
    %p65 = por %p63, %p64
    %p67 = scmp.ne.s32.totalorder %s52, %s66
    %p68 = scmp.eq.s32.totalorder %s21, 0
    %p69 = por %p67, %p68
    %s71 = sadd.s32 %s70, 1
    %p74 = scmp.eq.s32.totalorder %s15, 1
    %p75 = scmp.ne.s32.totalorder %s70, %s72
    %p76 = scmp.eq.s32.totalorder %s15, 0
    %p77 = por %p75, %p76
    %p78 = scmp.ne.s32.totalorder %s70, %s72
    %p79 = scmp.eq.s32.totalorder %s20, 1
    %p80 = por %p78, %p79
    %p81 = scmp.ne.s32.totalorder %s72, %s73
    %p82 = scmp.eq.s32.totalorder %s20, 0
    %p83 = por %p81, %p82
    %p84 = scmp.ne.s32.totalorder %s72, %s73
    %p85 = scmp.eq.s32.totalorder %s21, 1
    %p86 = por %p84, %p85
    %p88 = scmp.ne.s32.totalorder %s73, %s87
    %p89 = scmp.eq.s32.totalorder %s21, 0
    %p90 = por %p88, %p89
    %s92 = sadd.s32 %s91, 1
    %p95 = scmp.eq.s32.totalorder %s15, 1
    %p96 = scmp.ne.s32.totalorder %s91, %s93
    %p97 = scmp.eq.s32.totalorder %s15, 0
    %p98 = por %p96, %p97
    %p99 = scmp.ne.s32.totalorder %s91, %s93
    %p100 = scmp.eq.s32.totalorder %s20, 1
    %p101 = por %p99, %p100
    %p102 = scmp.ne.s32.totalorder %s93, %s94
    %p103 = scmp.eq.s32.totalorder %s20, 0
    %p104 = por %p102, %p103
    %p105 = scmp.ne.s32.totalorder %s93, %s94
    %p106 = scmp.eq.s32.totalorder %s21, 1
    %p107 = por %p105, %p106
    %p109 = scmp.ne.s32.totalorder %s94, %s108
    %p110 = scmp.eq.s32.totalorder %s21, 0
    %p111 = por %p109, %p110
    %s113 = sadd.s32 %s112, 1
    %p116 = scmp.eq.s32.totalorder %s15, 1
    %p117 = scmp.ne.s32.totalorder %s112, %s114
    %p118 = scmp.eq.s32.totalorder %s15, 0
    %p119 = por %p117, %p118
    %p120 = scmp.ne.s32.totalorder %s112, %s114
    %p121 = scmp.eq.s32.totalorder %s20, 1
    %p122 = por %p120, %p121
    %p123 = scmp.ne.s32.totalorder %s114, %s115
    %p124 = scmp.eq.s32.totalorder %s20, 0
    %p125 = por %p123, %p124
    %p126 = scmp.ne.s32.totalorder %s114, %s115
    %p127 = scmp.eq.s32.totalorder %s21, 1
    %p128 = por %p126, %p127
    %p130 = scmp.ne.s32.totalorder %s115, %s129
    %p131 = scmp.eq.s32.totalorder %s21, 0
    %p132 = por %p130, %p131
    %s134 = sadd.s32 %s133, 1
    %p137 = scmp.eq.s32.totalorder %s15, 1
    %p138 = scmp.ne.s32.totalorder %s133, %s135
    %p139 = scmp.eq.s32.totalorder %s15, 0
    %p140 = por %p138, %p139
    %p141 = scmp.ne.s32.totalorder %s133, %s135
    %p142 = scmp.eq.s32.totalorder %s20, 1
    %p143 = por %p141, %p142
    %p144 = scmp.ne.s32.totalorder %s135, %s136
    %p145 = scmp.eq.s32.totalorder %s20, 0
    %p146 = por %p144, %p145
    %p147 = scmp.ne.s32.totalorder %s135, %s136
    %p148 = scmp.eq.s32.totalorder %s21, 1
    %p149 = por %p147, %p148
    %p151 = scmp.ne.s32.totalorder %s136, %s150
    %p152 = scmp.eq.s32.totalorder %s21, 0
    %p153 = por %p151, %p152
    %s155 = sadd.s32 %s154, 1
    %p158 = scmp.eq.s32.totalorder %s15, 1
    %p159 = scmp.ne.s32.totalorder %s154, %s156
    %p160 = scmp.eq.s32.totalorder %s15, 0
    %p161 = por %p159, %p160
    %p162 = scmp.ne.s32.totalorder %s154, %s156
    %p163 = scmp.eq.s32.totalorder %s20, 1
    %p164 = por %p162, %p163
    %p165 = scmp.ne.s32.totalorder %s156, %s157
    %p166 = scmp.eq.s32.totalorder %s20, 0
    %p167 = por %p165, %p166
    %p168 = scmp.ne.s32.totalorder %s156, %s157
    %p169 = scmp.eq.s32.totalorder %s21, 1
    %p170 = por %p168, %p169
    %p172 = scmp.ne.s32.totalorder %s157, %s171
    %p173 = scmp.eq.s32.totalorder %s21, 0
    %p174 = por %p172, %p173
    %s176 = sadd.s32 %s175, 1
    %p179 = scmp.eq.s32.totalorder %s15, 1
    %p180 = scmp.ne.s32.totalorder %s175, %s177
    %p181 = scmp.eq.s32.totalorder %s15, 0
    %p182 = por %p180, %p181
    %p183 = scmp.ne.s32.totalorder %s175, %s177
    %p184 = scmp.eq.s32.totalorder %s20, 1
    %p185 = por %p183, %p184
    %p186 = scmp.ne.s32.totalorder %s177, %s178
    %p187 = scmp.eq.s32.totalorder %s20, 0
    %p188 = por %p186, %p187
    %p189 = scmp.ne.s32.totalorder %s177, %s178
    %p190 = scmp.eq.s32.totalorder %s21, 1
    %p191 = por %p189, %p190
    %p193 = scmp.ne.s32.totalorder %s178, %s192
    %p194 = scmp.eq.s32.totalorder %s21, 0
    %p195 = por %p193, %p194
    %s197 = sadd.s32 %s196, 1
    %p200 = scmp.eq.s32.totalorder %s15, 1
    %p201 = scmp.ne.s32.totalorder %s196, %s198
    %p202 = scmp.eq.s32.totalorder %s15, 0
    %p203 = por %p201, %p202
    %p204 = scmp.ne.s32.totalorder %s196, %s198
    %p205 = scmp.eq.s32.totalorder %s20, 1
    %p206 = por %p204, %p205
    %p207 = scmp.ne.s32.totalorder %s198, %s199
    %p208 = scmp.eq.s32.totalorder %s20, 0
    %p209 = por %p207, %p208
    %p210 = scmp.ne.s32.totalorder %s198, %s199
    %p211 = scmp.eq.s32.totalorder %s21, 1
    %p212 = por %p210, %p211
    %p214 = scmp.ne.s32.totalorder %s199, %s213
    %p215 = scmp.eq.s32.totalorder %s21, 0
    %p216 = por %p214, %p215
    %s217 = ssub.s32 %s15, %s22
    %p218 = scmp.eq.s32.totalorder %s217, 0
    %s220 = sadd.s32 %s219, 1
    %s221 = scalar_select %p218, %s219, %s220
    %p224 = pneg %p218
    %p225 = scmp.eq.s32.totalorder %s15, 1
    %p226 = por %p224, %p225
    %p227 = scmp.ne.s32.totalorder %s219, %s222
    %p228 = scmp.eq.s32.totalorder %s15, 0
    %p229 = por %p227, %p228
    %p230 = scmp.ne.s32.totalorder %s219, %s222
    %p231 = scmp.eq.s32.totalorder %s20, 1
    %p232 = por %p230, %p231
    %p233 = scmp.ne.s32.totalorder %s222, %s223
    %p234 = scmp.eq.s32.totalorder %s20, 0
    %p235 = por %p233, %p234
    %p236 = scmp.ne.s32.totalorder %s222, %s223
    %p237 = scmp.eq.s32.totalorder %s21, 1
    %p238 = por %p236, %p237
    %p240 = scmp.ne.s32.totalorder %s223, %s239
    %p241 = scmp.eq.s32.totalorder %s21, 0
    %p242 = por %p240, %p241
    %p243 = scmp.le.s32.totalorder 1, %s15
    %p244 = scmp.lt.s32.totalorder %s15, 3
    %p245 = pnand %p243, %p244
    %p246 = pneg %p245
    // Predicated region
    $region9: #{tpu_custom_call.1} parent=5 // pred_check
      _
    $region10: #{tpu_custom_call.1} parent=5 // pred_check_branch
      %248 = sbr.rel (%p245) target = $region12
    $region11: #{tpu_custom_call.1} parent=5 // pred_region
      %s249 = ssub.s32 %s15, 1
      // Predicated region
      $region13: #{tpu_custom_call.1} parent=11 // pred_check
        %p250 = pneg %p62
      $region14: #{tpu_custom_call.1} parent=11 // pred_check_branch
        %252 = sbr.rel (%p250) target = $region16
      $region15: #{tpu_custom_call.1} parent=11 // pred_region
        _
      $region16: #{tpu_custom_call.1} parent=11 // pred_fallthru
        _
      // Predicated region
      $region17: #{tpu_custom_call.1} parent=11 // pred_check
        %p253 = pneg %p83
      $region18: #{tpu_custom_call.1} parent=11 // pred_check_branch
        %255 = sbr.rel (%p253) target = $region20
      $region19: #{tpu_custom_call.1} parent=11 // pred_region
        _
      $region20: #{tpu_custom_call.1} parent=11 // pred_fallthru
        _
      // Predicated region
      $region21: #{tpu_custom_call.1} parent=11 // pred_check
        %p256 = pneg %p104
      $region22: #{tpu_custom_call.1} parent=11 // pred_check_branch
        %258 = sbr.rel (%p256) target = $region24
      $region23: #{tpu_custom_call.1} parent=11 // pred_region
        _
      $region24: #{tpu_custom_call.1} parent=11 // pred_fallthru
        _
      // Predicated region
      $region25: #{tpu_custom_call.1} parent=11 // pred_check
        %p259 = pneg %p125
      $region26: #{tpu_custom_call.1} parent=11 // pred_check_branch
        %261 = sbr.rel (%p259) target = $region28
      $region27: #{tpu_custom_call.1} parent=11 // pred_region
        _
      $region28: #{tpu_custom_call.1} parent=11 // pred_fallthru
        _
      // Predicated region
      $region29: #{tpu_custom_call.1} parent=11 // pred_check
        %p262 = pneg %p146
      $region30: #{tpu_custom_call.1} parent=11 // pred_check_branch
        %264 = sbr.rel (%p262) target = $region32
      $region31: #{tpu_custom_call.1} parent=11 // pred_region
        _
      $region32: #{tpu_custom_call.1} parent=11 // pred_fallthru
        _
      // Predicated region
      $region33: #{tpu_custom_call.1} parent=11 // pred_check
        %p265 = pneg %p167
      $region34: #{tpu_custom_call.1} parent=11 // pred_check_branch
        %267 = sbr.rel (%p265) target = $region36
      $region35: #{tpu_custom_call.1} parent=11 // pred_region
        _
      $region36: #{tpu_custom_call.1} parent=11 // pred_fallthru
        _
      // Predicated region
      $region37: #{tpu_custom_call.1} parent=11 // pred_check
        %p268 = pneg %p188
      $region38: #{tpu_custom_call.1} parent=11 // pred_check_branch
        %270 = sbr.rel (%p268) target = $region40
      $region39: #{tpu_custom_call.1} parent=11 // pred_region
        _
      $region40: #{tpu_custom_call.1} parent=11 // pred_fallthru
        _
      // Predicated region
      $region41: #{tpu_custom_call.1} parent=11 // pred_check
        %p271 = pneg %p209
      $region42: #{tpu_custom_call.1} parent=11 // pred_check_branch
        %273 = sbr.rel (%p271) target = $region44
      $region43: #{tpu_custom_call.1} parent=11 // pred_region
        _
      $region44: #{tpu_custom_call.1} parent=11 // pred_fallthru
        _
    $region12: #{tpu_custom_call.1} parent=5 // pred_fallthru
      _
    %p274 = scmp.lt.s32.totalorder %s15, 2
    // Predicated region
    $region45: #{tpu_custom_call.1} parent=5 // pred_check
      %p275 = pneg %p274
    $region46: #{tpu_custom_call.1} parent=5 // pred_check_branch
      %277 = sbr.rel (%p275) target = $region48
    $region47: #{tpu_custom_call.1} parent=5 // pred_region
      // Predicated region
      $region49: #{tpu_custom_call.1} parent=47 // pred_check
        %p278 = pneg %p35
      $region50: #{tpu_custom_call.1} parent=47 // pred_check_branch
        %280 = sbr.rel (%p278) target = $region52
      $region51: #{tpu_custom_call.1} parent=47 // pred_region
        %s281 = smul.u32 2, %s15
        %p282 = scmp.lt.s32.totalorder %s281, 3
        %s283 = scalar_select %p282, %s281, 3
        %s284 = smul.addr %s283, 8
        %s285 = scalar_lea.vmem %s0, %s284
        %s286 = smul.u32 2, %s15
      $region52: #{tpu_custom_call.1} parent=47 // pred_fallthru
        _
    $region48: #{tpu_custom_call.1} parent=5 // pred_fallthru
      _
    %p287 = scmp.le.s32.totalorder 1, %s15
    %p288 = scmp.lt.s32.totalorder %s15, 3
    %p289 = pnand %p287, %p288
    %p290 = pneg %p289
    // Predicated region
    $region53: #{tpu_custom_call.1} parent=5 // pred_check
      _
    $region54: #{tpu_custom_call.1} parent=5 // pred_check_branch
      %292 = sbr.rel (%p289) target = $region56
    $region55: #{tpu_custom_call.1} parent=5 // pred_region
      %s293 = ssub.s32 %s15, 1
      %s294 = smul.u32 2, %s20
      %p295 = scmp.lt.s32.totalorder %s294, 3
      %s296 = scalar_select %p295, %s294, 3
      %s297 = smul.addr %s296, 8
      %s298 = scalar_lea.vmem %s0, %s297
      %p299 = pneg %p41
      %p300 = pneg %p38
      %p301 = pneg %p62
      %p302 = pneg %p59
      %p303 = pneg %p83
      %p304 = pneg %p80
      %p305 = pneg %p104
      %p306 = pneg %p101
      %p307 = pneg %p125
      %p308 = pneg %p122
      %p309 = pneg %p146
      %p310 = pneg %p143
      %p311 = pneg %p167
      %p312 = pneg %p164
      %p313 = pneg %p188
      %p314 = pneg %p185
      %p315 = pneg %p209
      %p316 = pneg %p206
      %p317 = pneg %p235
      %p318 = pneg %p232
      %s319 = smul.u32 2, %s20
      %p320 = scmp.lt.s32.totalorder %s319, 3
      %s321 = scalar_select %p320, %s319, 3
      %s322 = smul.addr %s321, 8
      %s323 = scalar_lea.vmem %s9, %s322
      %s324 = smul.u32 2, %s20
      %p325 = scmp.lt.s32.totalorder %s324, 3
      %s326 = scalar_select %p325, %s324, 3
      %s327 = smul.addr %s326, 8
      %s328 = scalar_lea.vmem %s0, %s327
      %s329 = smul.u32 2, %s20
      %s330 = smul.u32 2, %s20
      %p331 = scmp.lt.s32.totalorder %s330, 3
      %s332 = scalar_select %p331, %s330, 3
      %s333 = smul.addr %s332, 8
      %s334 = scalar_lea.vmem %s9, %s333
      %s335 = smul.u32 2, %s20
      %v337 = vld [vmem:[%s328] sm:$0xff]
      %v338 = vld [vmem:[%s328 + $0x8] sm:$0xff]
      %v339 = vpack.c.bf16 %v338, %v337
      %v340 = vld [vmem:[%s1] sm:$0xf]
      %vm341 = vcmask 64512
      %v343 = vsel %vm341, %v339, 0
      %vm345 = vcmask 1043456
      %v347 = vsel %vm345, %v340, 0
      %349 = vmatprep.subr.bf16.mxu0 0
      %350 = vmatpush1.bf16.msra.mxu0 %v347
      %351 = vmatprep.subr.bf16.mxu0 0
      %352 = vmatpush1.bf16.msra.mxu0 0
      %353 = vmatprep.subr.bf16.mxu0 0
      %354 = vmatpush1.bf16.msra.mxu0 0
      %355 = vmatprep.subr.bf16.mxu0 0
      %356 = vmatpush1.bf16.msra.mxu0 0
      %357 = vmatprep.subr.bf16.mxu0 0
      %358 = vmatpush1.bf16.msra.mxu0 0
      %359 = vmatprep.subr.bf16.mxu0 0
      %360 = vmatpush1.bf16.msra.mxu0 0
      %361 = vmatprep.subr.bf16.mxu0 0
      %362 = vmatpush1.bf16.msra.mxu0 0
      %363 = vmatprep.subr.bf16.mxu0 0
      %364 = vmatpush1.bf16.msra.mxu0 0
      %365 = vmatprep.subr.bf16.mxu0 0
      %366 = vmatpush1.bf16.msra.mxu0 0
      %367 = vmatprep.subr.bf16.mxu0 0
      %368 = vmatpush1.bf16.msra.mxu0 0
      %369 = vmatprep.subr.bf16.mxu0 0
      %370 = vmatpush1.bf16.msra.mxu0 0
      %371 = vmatprep.subr.bf16.mxu0 0
      %372 = vmatpush1.bf16.msra.mxu0 0
      %373 = vmatprep.subr.bf16.mxu0 0
      %374 = vmatpush1.bf16.msra.mxu0 0
      %375 = vmatprep.subr.bf16.mxu0 0
      %376 = vmatpush1.bf16.msra.mxu0 0
      %377 = vmatprep.subr.bf16.mxu0 0
      %378 = vmatpush1.bf16.msra.mxu0 0
      %379 = vmatprep.subr.bf16.mxu0 0
      %380 = vmatpush1.bf16.msra.mxu0 0
      %381 = vmatprep.mubr.bf16.mxu0 0
      %382 = vmatmul.mubr.bf16.gmra.mrb[0].mxu0 %v343
      %v383 = vpop.f32.mrb[0].mxu0
      %v384 = vadd.f32 0.0, %v383
      %v385 = vpop.f32.mrb[0].mxu0
      %v386 = vpop.f32.mrb[0].mxu0
      %v387 = vadd.f32 0.0, %v386
      %v388 = vpop.f32.mrb[0].mxu0
      %389 = vdwg.mxu0
      %v390 = vmul.f32 %v384, 0.5
      %v391 = vmul.f32 %v387, 0.5
      %v392 = vmul.f32 %v384, %v384
      %v393 = vmul.f32 %v387, %v387
      %v394 = vmul.f32 %v392, %v384
      %v395 = vmul.f32 %v393, %v387
      %v396 = vmul.f32 %v394, 0.044715
      %v397 = vmul.f32 %v395, 0.044715
      %v398 = vadd.f32 %v384, %v396
      %v399 = vadd.f32 %v387, %v397
      %v400 = vmul.f32 %v398, 0.7978846
      %v401 = vmul.f32 %v399, 0.7978846
      %v402 = vtanh.pop %v400
      %v403 = vtanh.pop %v401
      %v404 = vadd.f32 %v402, 1.0
      %v405 = vadd.f32 %v403, 1.0
      %v406 = vmul.f32 %v390, %v404
      %v407 = vmul.f32 %v391, %v405
      %v408 = vpack.c.bf16 %v407, %v406
      %v409 = vld [vmem:[%s2] sm:$0xf]
      %v410 = vld [vmem:[%s2 + $0x4] sm:$0xf]
      %v413 = vunpack.c.l.b16 %v409
      %v414 = vunpack.c.l.b16 %v410
      %v415 = vpack.c.b16 %v414, %v413
      %vm417 = vcmask 130048
      %v419 = vsel %vm417, %v408, 0
      %421 = vmatprep.subr.bf16.mxu0 0
      %422 = vmatpush1.bf16.msra.mxu0 %v415
      %423 = vmatprep.subr.bf16.mxu0 0
      %424 = vmatpush1.bf16.msra.mxu0 0
      %425 = vmatprep.subr.bf16.mxu0 0
      %426 = vmatpush1.bf16.msra.mxu0 0
      %427 = vmatprep.subr.bf16.mxu0 0
      %428 = vmatpush1.bf16.msra.mxu0 0
      %429 = vmatprep.subr.bf16.mxu0 0
      %430 = vmatpush1.bf16.msra.mxu0 0
      %431 = vmatprep.subr.bf16.mxu0 0
      %432 = vmatpush1.bf16.msra.mxu0 0
      %433 = vmatprep.subr.bf16.mxu0 0
      %434 = vmatpush1.bf16.msra.mxu0 0
      %435 = vmatprep.subr.bf16.mxu0 0
      %436 = vmatpush1.bf16.msra.mxu0 0
      %437 = vmatprep.subr.bf16.mxu0 0
      %438 = vmatpush1.bf16.msra.mxu0 0
      %439 = vmatprep.subr.bf16.mxu0 0
      %440 = vmatpush1.bf16.msra.mxu0 0
      %441 = vmatprep.subr.bf16.mxu0 0
      %442 = vmatpush1.bf16.msra.mxu0 0
      %443 = vmatprep.subr.bf16.mxu0 0
      %444 = vmatpush1.bf16.msra.mxu0 0
      %445 = vmatprep.subr.bf16.mxu0 0
      %446 = vmatpush1.bf16.msra.mxu0 0
      %447 = vmatprep.subr.bf16.mxu0 0
      %448 = vmatpush1.bf16.msra.mxu0 0
      %449 = vmatprep.subr.bf16.mxu0 0
      %450 = vmatpush1.bf16.msra.mxu0 0
      %451 = vmatprep.subr.bf16.mxu0 0
      %452 = vmatpush1.bf16.msra.mxu0 0
      %453 = vmatprep.mubr.bf16.mxu0 0
      %454 = vmatmul.mubr.bf16.gmra.mrb[0].mxu0 %v419
      %v455 = vpop.f32.mrb[0].mxu0
      %v456 = vadd.f32 0.0, %v455
      %v457 = vpop.f32.mrb[0].mxu0
      %v458 = vpop.f32.mrb[0].mxu0
      %v459 = vadd.f32 0.0, %v458
      %v460 = vpop.f32.mrb[0].mxu0
      %461 = vdwg.mxu0
      %v462 = vmul.f32 %v456, 0.5
      %v463 = vmul.f32 %v459, 0.5
      %v464 = vmul.f32 %v456, %v456
      %v465 = vmul.f32 %v459, %v459
      %v466 = vmul.f32 %v464, %v456
      %v467 = vmul.f32 %v465, %v459
      %v468 = vmul.f32 %v466, 0.044715
      %v469 = vmul.f32 %v467, 0.044715
      %v470 = vadd.f32 %v456, %v468
      %v471 = vadd.f32 %v459, %v469
      %v472 = vmul.f32 %v470, 0.7978846
      %v473 = vmul.f32 %v471, 0.7978846
      %v474 = vtanh.pop %v472
      %v475 = vtanh.pop %v473
      %v476 = vadd.f32 %v474, 1.0
      %v477 = vadd.f32 %v475, 1.0
      %v478 = vmul.f32 %v462, %v476
      %v479 = vmul.f32 %v463, %v477
      %v480 = vpack.c.bf16 %v479, %v478
      %v481 = vld [vmem:[%s3] sm:$0xf]
      %v482 = vld [vmem:[%s3 + $0x4] sm:$0xf]
      %v483 = vld [vmem:[%s4] sm:$0x1]
      %v485 = vlaneseq
      %v486 = vshrl.u32 %v485, 7
      %v487 = vsub.s32 0, %v486
      %v488 = vrot.slane %v483, %v487
      %v492 = vunpack.c.l.b16 %v481
      %v493 = vunpack.c.l.b16 %v482
      %v494 = vpack.c.b16 %v493, %v492
      %v497 = vsel %vm417, %v480, 0
      %499 = vmatprep.subr.bf16.mxu0 0
      %500 = vmatpush1.bf16.msra.mxu0 %v494
      %501 = vmatprep.subr.bf16.mxu0 0
      %502 = vmatpush1.bf16.msra.mxu0 0
      %503 = vmatprep.subr.bf16.mxu0 0
      %504 = vmatpush1.bf16.msra.mxu0 0
      %505 = vmatprep.subr.bf16.mxu0 0
      %506 = vmatpush1.bf16.msra.mxu0 0
      %507 = vmatprep.subr.bf16.mxu0 0
      %508 = vmatpush1.bf16.msra.mxu0 0
      %509 = vmatprep.subr.bf16.mxu0 0
      %510 = vmatpush1.bf16.msra.mxu0 0
      %511 = vmatprep.subr.bf16.mxu0 0
      %512 = vmatpush1.bf16.msra.mxu0 0
      %513 = vmatprep.subr.bf16.mxu0 0
      %514 = vmatpush1.bf16.msra.mxu0 0
      %515 = vmatprep.subr.bf16.mxu0 0
      %516 = vmatpush1.bf16.msra.mxu0 0
      %517 = vmatprep.subr.bf16.mxu0 0
      %518 = vmatpush1.bf16.msra.mxu0 0
      %519 = vmatprep.subr.bf16.mxu0 0
      %520 = vmatpush1.bf16.msra.mxu0 0
      %521 = vmatprep.subr.bf16.mxu0 0
      %522 = vmatpush1.bf16.msra.mxu0 0
      %523 = vmatprep.subr.bf16.mxu0 0
      %524 = vmatpush1.bf16.msra.mxu0 0
      %525 = vmatprep.subr.bf16.mxu0 0
      %526 = vmatpush1.bf16.msra.mxu0 0
      %527 = vmatprep.subr.bf16.mxu0 0
      %528 = vmatpush1.bf16.msra.mxu0 0
      %529 = vmatprep.subr.bf16.mxu0 0
      %530 = vmatpush1.bf16.msra.mxu0 0
      %531 = vmatprep.mubr.bf16.mxu0 0
      %532 = vmatmul.mubr.bf16.gmra.mrb[0].mxu0 %v497
      %v533 = vpop.f32.mrb[0].mxu0
      %v534 = vadd.f32 %v488, %v533
      %v535 = vpop.f32.mrb[0].mxu0
      %v536 = vpop.f32.mrb[0].mxu0
      %v537 = vadd.f32 %v488, %v536
      %v538 = vpop.f32.mrb[0].mxu0
      %539 = vdwg.mxu0
      %v540 = vmul.f32 %v534, 0.5
      %v541 = vmul.f32 %v537, 0.5
      %v542 = vmul.f32 %v534, %v534
      %v543 = vmul.f32 %v537, %v537
      %v544 = vmul.f32 %v542, %v534
      %v545 = vmul.f32 %v543, %v537
      %v546 = vmul.f32 %v544, 0.044715
      %v547 = vmul.f32 %v545, 0.044715
      %v548 = vadd.f32 %v534, %v546
      %v549 = vadd.f32 %v537, %v547
      %v550 = vmul.f32 %v548, 0.7978846
      %v551 = vmul.f32 %v549, 0.7978846
      %v552 = vtanh.pop %v550
      %v553 = vtanh.pop %v551
      %v554 = vadd.f32 %v552, 1.0
      %v555 = vadd.f32 %v553, 1.0
      %v556 = vmul.f32 %v540, %v554
      %v557 = vmul.f32 %v541, %v555
      %v558 = vpack.c.bf16 %v557, %v556
      %v559 = vld [vmem:[%s5] sm:$0xf]
      %v560 = vld [vmem:[%s5 + $0x4] sm:$0xf]
      %v561 = vld [vmem:[%s5 + $0x8] sm:$0xf]
      %v562 = vld [vmem:[%s5 + $0xc] sm:$0xf]
      %v563 = vld [vmem:[%s5 + $0x10] sm:$0xf]
      %v564 = vld [vmem:[%s5 + $0x14] sm:$0xf]
      %v565 = vld [vmem:[%s5 + $0x18] sm:$0xf]
      %v566 = vld [vmem:[%s5 + $0x1c] sm:$0xf]
      %v567 = vld [vmem:[%s5 + $0x20] sm:$0xf]
      %v568 = vld [vmem:[%s5 + $0x24] sm:$0xf]
      %v569 = vld [vmem:[%s5 + $0x28] sm:$0xf]
      %v570 = vld [vmem:[%s5 + $0x2c] sm:$0xf]
      %v571 = vld [vmem:[%s5 + $0x30] sm:$0xf]
      %v572 = vld [vmem:[%s5 + $0x34] sm:$0xf]
      %v573 = vld [vmem:[%s5 + $0x38] sm:$0xf]
      %v574 = vld [vmem:[%s5 + $0x3c] sm:$0xf]
      %v575 = vld [vmem:[%s6] sm:$0x1]
      %v577 = vlaneseq
      %v578 = vshrl.u32 %v577, 7
      %v579 = vsub.s32 0, %v578
      %v580 = vrot.slane %v575, %v579
      %v598 = vunpack.c.l.b16 %v559
      %v599 = vunpack.c.l.b16 %v560
      %v600 = vunpack.c.l.b16 %v561
      %v601 = vunpack.c.l.b16 %v562
      %v602 = vunpack.c.l.b16 %v563
      %v603 = vunpack.c.l.b16 %v564
      %v604 = vunpack.c.l.b16 %v565
      %v605 = vunpack.c.l.b16 %v566
      %v606 = vunpack.c.l.b16 %v567
      %v607 = vunpack.c.l.b16 %v568
      %v608 = vunpack.c.l.b16 %v569
      %v609 = vunpack.c.l.b16 %v570
      %v610 = vunpack.c.l.b16 %v571
      %v611 = vunpack.c.l.b16 %v572
      %v612 = vunpack.c.l.b16 %v573
      %v613 = vunpack.c.l.b16 %v574
      %v614 = vpack.c.b16 %v599, %v598
      %v615 = vpack.c.b16 %v601, %v600
      %v616 = vpack.c.b16 %v603, %v602
      %v617 = vpack.c.b16 %v605, %v604
      %v618 = vpack.c.b16 %v607, %v606
      %v619 = vpack.c.b16 %v609, %v608
      %v620 = vpack.c.b16 %v611, %v610
      %v621 = vpack.c.b16 %v613, %v612
      %630 = vmatprep.subr.bf16.mxu0 0
      %631 = vmatpush1.bf16.msra.mxu0 %v614
      %632 = vmatprep.subr.bf16.mxu0 0
      %633 = vmatpush1.bf16.msra.mxu0 %v615
      %634 = vmatprep.subr.bf16.mxu0 0
      %635 = vmatpush1.bf16.msra.mxu0 %v616
      %636 = vmatprep.subr.bf16.mxu0 0
      %637 = vmatpush1.bf16.msra.mxu0 %v617
      %638 = vmatprep.subr.bf16.mxu0 0
      %639 = vmatpush1.bf16.msra.mxu0 %v618
      %640 = vmatprep.subr.bf16.mxu0 0
      %641 = vmatpush1.bf16.msra.mxu0 %v619
      %642 = vmatprep.subr.bf16.mxu0 0
      %643 = vmatpush1.bf16.msra.mxu0 %v620
      %644 = vmatprep.subr.bf16.mxu0 0
      %645 = vmatpush1.bf16.msra.mxu0 %v621
      %646 = vmatprep.subr.bf16.mxu0 0
      %647 = vmatpush1.bf16.msra.mxu0 0
      %648 = vmatprep.subr.bf16.mxu0 0
      %649 = vmatpush1.bf16.msra.mxu0 0
      %650 = vmatprep.subr.bf16.mxu0 0
      %651 = vmatpush1.bf16.msra.mxu0 0
      %652 = vmatprep.subr.bf16.mxu0 0
      %653 = vmatpush1.bf16.msra.mxu0 0
      %654 = vmatprep.subr.bf16.mxu0 0
      %655 = vmatpush1.bf16.msra.mxu0 0
      %656 = vmatprep.subr.bf16.mxu0 0
      %657 = vmatpush1.bf16.msra.mxu0 0
      %658 = vmatprep.subr.bf16.mxu0 0
      %659 = vmatpush1.bf16.msra.mxu0 0
      %660 = vmatprep.subr.bf16.mxu0 0
      %661 = vmatpush1.bf16.msra.mxu0 0
      %662 = vmatprep.mubr.bf16.mxu0 0
      %663 = vmatmul.mubr.bf16.gmra.mrb[0].mxu0 %v558
      %v664 = vpop.f32.mrb[0].mxu0
      %v665 = vadd.f32 %v580, %v664
      %v666 = vpop.f32.mrb[0].mxu0
      %v667 = vpop.f32.mrb[0].mxu0
      %v668 = vadd.f32 %v580, %v667
      %v669 = vpop.f32.mrb[0].mxu0
      %670 = vdwg.mxu0
      %v671 = vmul.f32 %v665, 0.5
      %v672 = vmul.f32 %v668, 0.5
      %v673 = vmul.f32 %v665, %v665
      %v674 = vmul.f32 %v668, %v668
      %v675 = vmul.f32 %v673, %v665
      %v676 = vmul.f32 %v674, %v668
      %v677 = vmul.f32 %v675, 0.044715
      %v678 = vmul.f32 %v676, 0.044715
      %v679 = vadd.f32 %v665, %v677
      %v680 = vadd.f32 %v668, %v678
      %v681 = vmul.f32 %v679, 0.7978846
      %v682 = vmul.f32 %v680, 0.7978846
      %v683 = vtanh.pop %v681
      %v684 = vtanh.pop %v682
      %v685 = vadd.f32 %v683, 1.0
      %v686 = vadd.f32 %v684, 1.0
      %v687 = vmul.f32 %v671, %v685
      %v688 = vmul.f32 %v672, %v686
      %v689 = vpack.c.bf16 %v688, %v687
      %v690 = vld [vmem:[%s7] sm:$0xf]
      %v691 = vld [vmem:[%s7 + $0x4] sm:$0xf]
      %v692 = vld [vmem:[%s7 + $0x8] sm:$0xf]
      %v693 = vld [vmem:[%s7 + $0xc] sm:$0xf]
      %v694 = vld [vmem:[%s7 + $0x10] sm:$0xf]
      %v695 = vld [vmem:[%s7 + $0x14] sm:$0xf]
      %v696 = vld [vmem:[%s7 + $0x18] sm:$0xf]
      %v697 = vld [vmem:[%s7 + $0x1c] sm:$0xf]
      %v698 = vld [vmem:[%s7 + $0x20] sm:$0xf]
      %v699 = vld [vmem:[%s7 + $0x24] sm:$0xf]
      %v700 = vld [vmem:[%s7 + $0x28] sm:$0xf]
      %v701 = vld [vmem:[%s7 + $0x2c] sm:$0xf]
      %v702 = vld [vmem:[%s7 + $0x30] sm:$0xf]
      %v703 = vld [vmem:[%s7 + $0x34] sm:$0xf]
      %v704 = vld [vmem:[%s7 + $0x38] sm:$0xf]
      %v705 = vld [vmem:[%s7 + $0x3c] sm:$0xf]
      %v706 = vld [vmem:[%s8] sm:$0x1]
      %v708 = vlaneseq
      %v709 = vshrl.u32 %v708, 7
      %v710 = vsub.s32 0, %v709
      %v711 = vrot.slane %v706, %v710
      %v729 = vunpack.c.l.b16 %v690
      %v730 = vunpack.c.l.b16 %v691
      %v731 = vunpack.c.l.b16 %v692
      %v732 = vunpack.c.l.b16 %v693
      %v733 = vunpack.c.l.b16 %v694
      %v734 = vunpack.c.l.b16 %v695
      %v735 = vunpack.c.l.b16 %v696
      %v736 = vunpack.c.l.b16 %v697
      %v737 = vunpack.c.l.b16 %v698
      %v738 = vunpack.c.l.b16 %v699
      %v739 = vunpack.c.l.b16 %v700
      %v740 = vunpack.c.l.b16 %v701
      %v741 = vunpack.c.l.b16 %v702
      %v742 = vunpack.c.l.b16 %v703
      %v743 = vunpack.c.l.b16 %v704
      %v744 = vunpack.c.l.b16 %v705
      %v745 = vpack.c.b16 %v730, %v729
      %v746 = vpack.c.b16 %v732, %v731
      %v747 = vpack.c.b16 %v734, %v733
      %v748 = vpack.c.b16 %v736, %v735
      %v749 = vpack.c.b16 %v738, %v737
      %v750 = vpack.c.b16 %v740, %v739
      %v751 = vpack.c.b16 %v742, %v741
      %v752 = vpack.c.b16 %v744, %v743
      %761 = vmatprep.subr.bf16.mxu0 0
      %762 = vmatpush1.bf16.msra.mxu0 %v745
      %763 = vmatprep.subr.bf16.mxu0 0
      %764 = vmatpush1.bf16.msra.mxu0 %v746
      %765 = vmatprep.subr.bf16.mxu0 0
      %766 = vmatpush1.bf16.msra.mxu0 %v747
      %767 = vmatprep.subr.bf16.mxu0 0
      %768 = vmatpush1.bf16.msra.mxu0 %v748
      %769 = vmatprep.subr.bf16.mxu0 0
      %770 = vmatpush1.bf16.msra.mxu0 %v749
      %771 = vmatprep.subr.bf16.mxu0 0
      %772 = vmatpush1.bf16.msra.mxu0 %v750
      %773 = vmatprep.subr.bf16.mxu0 0
      %774 = vmatpush1.bf16.msra.mxu0 %v751
      %775 = vmatprep.subr.bf16.mxu0 0
      %776 = vmatpush1.bf16.msra.mxu0 %v752
      %777 = vmatprep.subr.bf16.mxu0 0
      %778 = vmatpush1.bf16.msra.mxu0 0
      %779 = vmatprep.subr.bf16.mxu0 0
      %780 = vmatpush1.bf16.msra.mxu0 0
      %781 = vmatprep.subr.bf16.mxu0 0
      %782 = vmatpush1.bf16.msra.mxu0 0
      %783 = vmatprep.subr.bf16.mxu0 0
      %784 = vmatpush1.bf16.msra.mxu0 0
      %785 = vmatprep.subr.bf16.mxu0 0
      %786 = vmatpush1.bf16.msra.mxu0 0
      %787 = vmatprep.subr.bf16.mxu0 0
      %788 = vmatpush1.bf16.msra.mxu0 0
      %789 = vmatprep.subr.bf16.mxu0 0
      %790 = vmatpush1.bf16.msra.mxu0 0
      %791 = vmatprep.subr.bf16.mxu0 0
      %792 = vmatpush1.bf16.msra.mxu0 0
      %793 = vmatprep.mubr.bf16.mxu0 0
      %794 = vmatmul.mubr.bf16.gmra.mrb[0].mxu0 %v689
      %v795 = vpop.f32.mrb[0].mxu0
      %v796 = vadd.f32 %v711, %v795
      %v797 = vpop.f32.mrb[0].mxu0
      %v798 = vpop.f32.mrb[0].mxu0
      %v799 = vadd.f32 %v711, %v798
      %v800 = vpop.f32.mrb[0].mxu0
      %801 = vdwg.mxu0
      %802 = vst.msk [vmem:[%s334] sm:$0xff] %vm341, %v796
      %803 = vst.msk [vmem:[%s334 + $0x8] sm:$0xff] %vm341, %v799
      %s804 = smul.u32 2, %s20
      %p805 = scmp.lt.s32.totalorder %s804, 3
      %s806 = scalar_select %p805, %s804, 3
      %s807 = smul.addr %s806, 8
      %s808 = scalar_lea.vmem %s9, %s807
      // Predicated region
      $region57: #{tpu_custom_call.1} parent=55 // pred_check
        %p809 = pneg %p232
      $region58: #{tpu_custom_call.1} parent=55 // pred_check_branch
        %811 = sbr.rel (%p809) target = $region60
      $region59: #{tpu_custom_call.1} parent=55 // pred_region
        %s812 = smul.u32 2, %s20
      $region60: #{tpu_custom_call.1} parent=55 // pred_fallthru
        _
    $region56: #{tpu_custom_call.1} parent=5 // pred_fallthru
      _
    %p813 = scmp.le.s32.totalorder 2, %s15
    // Predicated region
    $region61: #{tpu_custom_call.1} parent=5 // pred_check
      %p814 = pneg %p813
    $region62: #{tpu_custom_call.1} parent=5 // pred_check_branch
      %816 = sbr.rel (%p814) target = $region64
    $region63: #{tpu_custom_call.1} parent=5 // pred_region
      %s817 = ssub.s32 %s15, 2
      // Predicated region
      $region65: #{tpu_custom_call.1} parent=63 // pred_check
        %p818 = pneg %p238
      $region66: #{tpu_custom_call.1} parent=63 // pred_check_branch
        %820 = sbr.rel (%p818) target = $region68
      $region67: #{tpu_custom_call.1} parent=63 // pred_region
        %s821 = smul.u32 2, %s21
        %p822 = scmp.lt.s32.totalorder %s821, 3
        %s823 = scalar_select %p822, %s821, 3
        %s824 = smul.addr %s823, 8
        %s825 = scalar_lea.vmem %s9, %s824
      $region68: #{tpu_custom_call.1} parent=63 // pred_fallthru
        _
    $region64: #{tpu_custom_call.1} parent=5 // pred_fallthru
      _
  $region6: #{tpu_custom_call.1} parent=0 // loop_footer
    %s19 = sadd.s32 1, %s15
  $region7: #{tpu_custom_call.1} parent=0 // loop_footer_branch
    %14 = sbr.rel target = $region3
  $region8: #{tpu_custom_call.1} parent=0 // loop_exit
    _

</llo_original>
